<compile_context>
chip_gen: v7x
topology: tpu7x:2x2x1
jax: 0.10.0
libtpu: 0.0.40
codegen_flags: <defaults>
</compile_context>

<pallas_src>
import math

import jax
import jax.numpy as jnp
from jax.experimental import pallas as pl
from jax.experimental.pallas import tpu as pltpu


_SQRT_2_OVER_PI = math.sqrt(2.0 / math.pi)


def _round_up(a, b):
    return (a + b - 1) // b * b


def _mlp_kernel(x_ref, wfc_ref, bfc_ref, wproj_ref, bproj_ref, o_ref, acc_ref):
    # x_ref:     (tm, C)   bf16        wfc_ref:   (C, th)  bf16
    # bfc_ref:   (1, th)   f32         wproj_ref: (th, C)  bf16
    # bproj_ref: (1, C)    f32
    # o_ref:     (tm, C)   out dtype   acc_ref:   (tm, C)  f32 scratch
    j = pl.program_id(1)

    @pl.when(j == 0)
    def _():
        acc_ref[...] = jnp.zeros_like(acc_ref)

    # c_fc slice: (tm, C) @ (C, th) -> (tm, th), f32 accumulate on the MXU.
    h = jnp.dot(x_ref[...], wfc_ref[...], preferred_element_type=jnp.float32)
    h = h + bfc_ref[...]

    # GELU with tanh approximation in f32 (matches nn.GELU(approximate='tanh')).
    g = 0.5 * h * (1.0 + jnp.tanh(_SQRT_2_OVER_PI * (h + 0.044715 * h * h * h)))

    # Partial c_proj: (tm, th) @ (th, C), accumulated in f32 across the H grid.
    acc_ref[...] += jnp.dot(g.astype(wproj_ref.dtype), wproj_ref[...],
                            preferred_element_type=jnp.float32)

    @pl.when(j == pl.num_programs(1) - 1)
    def _():
        o_ref[...] = (acc_ref[...] + bproj_ref[...]).astype(o_ref.dtype)


def mlp_pallas(x, w_fc, b_fc, w_proj, b_proj, *, tm=256, th=512,
               compute_dtype=jnp.bfloat16):
    """x: (..., C).  Weights stored (in_features, out_features).  Returns (..., C)."""
    orig_shape = x.shape
    C = orig_shape[-1]
    H = w_fc.shape[1]
    M = math.prod(orig_shape[:-1])

    x2d = x.reshape(M, C)
    out_dtype = x.dtype

    # Token tile: multiple of 8 sublanes, capped at the (padded) token count.
    tm_eff = max(8, _round_up(min(tm, _round_up(M, 8)), 8))
    M_pad = _round_up(M, tm_eff)
    if M_pad != M:
        x2d = jnp.pad(x2d, ((0, M_pad - M), (0, 0)))

    # Hidden (reduction) tile: must divide H and be lane-aligned, else use full H.
    th_eff = th if (th <= H and H % th == 0 and th % 128 == 0) else H

    # bf16 matmul operands, f32 biases / accumulation.
    xc = x2d.astype(compute_dtype)
    wfc = w_fc.astype(compute_dtype)
    wpj = w_proj.astype(compute_dtype)
    bfc = b_fc.reshape(1, H).astype(jnp.float32)
    bpj = b_proj.reshape(1, C).astype(jnp.float32)

    grid = (M_pad // tm_eff, H // th_eff)

    # Rough VMEM budget (double-buffered tiles + f32 accumulator).  Only raise
    # the scoped limit when the tiles actually need it; cap well under physical.
    itm = jnp.dtype(compute_dtype).itemsize
    osz = jnp.dtype(out_dtype).itemsize
    vmem_est = (2 * (tm_eff * C * itm + C * th_eff * itm + th_eff * 4
                     + th_eff * C * itm + C * 4 + tm_eff * C * osz)
                + tm_eff * C * 4)
    vmem_limit = None
    if vmem_est > 24 * 1024 * 1024:
        vmem_limit = min(int(1.5 * vmem_est), 60 * 1024 * 1024)

    cost = pl.CostEstimate(
        flops=4 * M_pad * C * H,
        transcendentals=M_pad * H,
        bytes_accessed=(M_pad * C * itm + C * H * itm + H * C * itm
                        + H * 4 + C * 4 + M_pad * C * osz),
    )

    out2d = pl.pallas_call(
        _mlp_kernel,
        out_shape=jax.ShapeDtypeStruct((M_pad, C), out_dtype),
        grid_spec=pltpu.PrefetchScalarGridSpec(
            num_scalar_prefetch=0,
            grid=grid,
            in_specs=[
                pl.BlockSpec((tm_eff, C), lambda i, j: (i, 0)),    # x tile (fixed over j)
                pl.BlockSpec((C, th_eff), lambda i, j: (0, j)),    # W_fc column block
                pl.BlockSpec((1, th_eff), lambda i, j: (0, j)),    # b_fc block
                pl.BlockSpec((th_eff, C), lambda i, j: (j, 0)),    # W_proj row block
                pl.BlockSpec((1, C), lambda i, j: (0, 0)),         # b_proj
            ],
            out_specs=pl.BlockSpec((tm_eff, C), lambda i, j: (i, 0)),
            scratch_shapes=[pltpu.VMEM((tm_eff, C), jnp.float32)],
        ),
        compiler_params=pltpu.CompilerParams(
            dimension_semantics=("parallel", "arbitrary"),
            vmem_limit_bytes=vmem_limit,
        ),
        cost_estimate=cost,
    )(xc, wfc, bfc, wpj, bpj)

    return out2d[:M].reshape(orig_shape)


def mlp_reference(x, w_fc, b_fc, w_proj, b_proj):
    h = x @ w_fc + b_fc
    h = 0.5 * h * (1.0 + jnp.tanh(_SQRT_2_OVER_PI * (h + 0.044715 * h ** 3)))
    return h @ w_proj + b_proj


if __name__ == "__main__":
    # Small but lane-dense demo config: n_embd = 128, batch = 2, seq = 8.
    B, T, C = 2, 8, 128
    H = 4 * C

    key = jax.random.PRNGKey(0)
    k_x, k_wfc, k_bfc, k_wp, k_bp = jax.random.split(key, 5)

    x = jax.random.normal(k_x, (B, T, C), dtype=jnp.float32)
    # Deterministic synthetic params (nn.Linear weights transposed to (in, out)).
    w_fc = jax.random.normal(k_wfc, (C, H), dtype=jnp.float32) * (1.0 / math.sqrt(C))
    b_fc = jax.random.normal(k_bfc, (H,), dtype=jnp.float32) * 0.02
    w_proj = jax.random.normal(k_wp, (H, C), dtype=jnp.float32) * (1.0 / math.sqrt(H))
    b_proj = jax.random.normal(k_bp, (C,), dtype=jnp.float32) * 0.02

    # th=256 exercises the multi-step H reduction / accumulator path (H=512 -> 2 steps).
    out = mlp_pallas(x, w_fc, b_fc, w_proj, b_proj, tm=256, th=256)
    out = jax.block_until_ready(out)

    ref = mlp_reference(x, w_fc, b_fc, w_proj, b_proj)
    assert out.shape == (B, T, C)
    # bf16 matmul operands vs. f32 reference -> ~1e-2 level error expected.
    assert jnp.allclose(out, ref, atol=5e-2, rtol=5e-2), "mismatch vs reference"

    print("KERNEL_OK")
</pallas_src>

<mosaic_0001>
module attributes {stable_mosaic.version = 11 : i64} {
  func.func @_mlp_kernel(%arg0: i32, %arg1: i32, %arg2: memref<16x128xbf16, #tpu.memory_space<vmem>>, %arg3: memref<128x256xbf16, #tpu.memory_space<vmem>>, %arg4: memref<1x256xf32, #tpu.memory_space<vmem>>, %arg5: memref<256x128xbf16, #tpu.memory_space<vmem>>, %arg6: memref<1x128xf32, #tpu.memory_space<vmem>>, %arg7: memref<16x128xf32, #tpu.memory_space<vmem>>, %arg8: memref<16x128xf32, #tpu.memory_space<vmem>>) attributes {dimension_semantics = [#tpu.dimension_semantics<parallel>, #tpu.dimension_semantics<arbitrary>], iteration_bounds = array<i64: 1, 2>, scalar_prefetch = 0 : i64, scratch_operands = 1 : i64, tpu.core_type = #tpu.core_type<tc>, window_params = [{transform_indices = @transform_0, window_bounds = array<i64: 16, 128>}, {transform_indices = @transform_1, window_bounds = array<i64: 128, 256>}, {transform_indices = @transform_2, window_bounds = array<i64: 1, 256>}, {transform_indices = @transform_3, window_bounds = array<i64: 256, 128>}, {pipeline_mode = #tpu.pipeline_mode<synchronous>, transform_indices = @transform_4, window_bounds = array<i64: 1, 128>}, {transform_indices = @transform_5, window_bounds = array<i64: 16, 128>}]} {
    %c0_i32 = arith.constant 0 : i32
    %0 = arith.cmpi eq, %arg1, %c0_i32 : i32
    %1 = arith.extui %0 : i1 to i32
    %c0_i32_0 = arith.constant 0 : i32
    %2 = arith.cmpi ne, %1, %c0_i32_0 : i32
    scf.if %2 {
      %cst_18 = arith.constant 0.000000e+00 : f32
      %31 = vector.broadcast %cst_18 : f32 to vector<16x128xf32>
      %c0_19 = arith.constant 0 : index
      %c0_20 = arith.constant 0 : index
      %32 = vector.load %arg8[%c0_19, %c0_20] : memref<16x128xf32, #tpu.memory_space<vmem>>, vector<16x128xf32>
      tpu.vector_store %arg8[%c0_19, %c0_20], %31 {strides = array<i32>} : memref<16x128xf32, #tpu.memory_space<vmem>>, vector<16x128xf32>,
    } else {
    }
    %c0 = arith.constant 0 : index
    %c0_1 = arith.constant 0 : index
    %3 = vector.load %arg2[%c0, %c0_1] : memref<16x128xbf16, #tpu.memory_space<vmem>>, vector<16x128xbf16>
    %c0_2 = arith.constant 0 : index
    %c0_3 = arith.constant 0 : index
    %4 = vector.load %arg3[%c0_2, %c0_3] : memref<128x256xbf16, #tpu.memory_space<vmem>>, vector<128x256xbf16>
    %cst = arith.constant dense<0.000000e+00> : vector<16x256xf32>
    %5 = tpu.matmul %3, %4, %cst {dimension_numbers = #tpu.dot_dimension_numbers<[1], [0], [0], [1], [0, 0, 1, 1], [], []>} : vector<16x128xbf16>, vector<128x256xbf16>, vector<16x256xf32> -> vector<16x256xf32>
    %c0_4 = arith.constant 0 : index
    %c0_5 = arith.constant 0 : index
    %6 = vector.load %arg4[%c0_4, %c0_5] : memref<1x256xf32, #tpu.memory_space<vmem>>, vector<1x256xf32>
    %7 = vector.broadcast %6 : vector<1x256xf32> to vector<16x256xf32>
    %8 = arith.addf %5, %7 : vector<16x256xf32>
    %cst_6 = arith.constant 5.000000e-01 : f32
    %9 = vector.broadcast %cst_6 : f32 to vector<16x256xf32>
    %10 = arith.mulf %9, %8 : vector<16x256xf32>
    %cst_7 = arith.constant 4.471500e-02 : f32
    %11 = vector.broadcast %cst_7 : f32 to vector<16x256xf32>
    %12 = arith.mulf %11, %8 : vector<16x256xf32>
    %13 = arith.mulf %12, %8 : vector<16x256xf32>
    %14 = arith.mulf %13, %8 : vector<16x256xf32>
    %15 = arith.addf %8, %14 : vector<16x256xf32>
    %cst_8 = arith.constant 0.797884583 : f32
    %16 = vector.broadcast %cst_8 : f32 to vector<16x256xf32>
    %17 = arith.mulf %16, %15 : vector<16x256xf32>
    %18 = math.tanh %17 : vector<16x256xf32>
    %cst_9 = arith.constant 1.000000e+00 : f32
    %19 = vector.broadcast %cst_9 : f32 to vector<16x256xf32>
    %20 = arith.addf %19, %18 : vector<16x256xf32>
    %21 = arith.mulf %10, %20 : vector<16x256xf32>
    %c0_10 = arith.constant 0 : index
    %c0_11 = arith.constant 0 : index
    %22 = vector.load %arg8[%c0_10, %c0_11] : memref<16x128xf32, #tpu.memory_space<vmem>>, vector<16x128xf32>
    %23 = arith.truncf %21 : vector<16x256xf32> to vector<16x256xbf16>
    %c0_12 = arith.constant 0 : index
    %c0_13 = arith.constant 0 : index
    %24 = vector.load %arg5[%c0_12, %c0_13] : memref<256x128xbf16, #tpu.memory_space<vmem>>, vector<256x128xbf16>
    %cst_14 = arith.constant dense<0.000000e+00> : vector<16x128xf32>
    %25 = tpu.matmul %23, %24, %cst_14 {dimension_numbers = #tpu.dot_dimension_numbers<[1], [0], [0], [1], [0, 0, 1, 1], [], []>} : vector<16x256xbf16>, vector<256x128xbf16>, vector<16x128xf32> -> vector<16x128xf32>
    %26 = arith.addf %22, %25 : vector<16x128xf32>
    %c0_15 = arith.constant 0 : index
    %c0_16 = arith.constant 0 : index
    %27 = vector.load %arg8[%c0_15, %c0_16] : memref<16x128xf32, #tpu.memory_space<vmem>>, vector<16x128xf32>
    tpu.vector_store %arg8[%c0_15, %c0_16], %26 {strides = array<i32>} : memref<16x128xf32, #tpu.memory_space<vmem>>, vector<16x128xf32>,
    %c1_i32 = arith.constant 1 : i32
    %28 = arith.cmpi eq, %arg1, %c1_i32 : i32
    %29 = arith.extui %28 : i1 to i32
    %c0_i32_17 = arith.constant 0 : i32
    %30 = arith.cmpi ne, %29, %c0_i32_17 : i32
    scf.if %30 {
      %c0_18 = arith.constant 0 : index
      %c0_19 = arith.constant 0 : index
      %31 = vector.load %arg8[%c0_18, %c0_19] : memref<16x128xf32, #tpu.memory_space<vmem>>, vector<16x128xf32>
      %c0_20 = arith.constant 0 : index
      %c0_21 = arith.constant 0 : index
      %32 = vector.load %arg6[%c0_20, %c0_21] : memref<1x128xf32, #tpu.memory_space<vmem>>, vector<1x128xf32>
      %33 = vector.broadcast %32 : vector<1x128xf32> to vector<16x128xf32>
      %34 = arith.addf %31, %33 : vector<16x128xf32>
      %c0_22 = arith.constant 0 : index
      %c0_23 = arith.constant 0 : index
      %35 = vector.load %arg7[%c0_22, %c0_23] : memref<16x128xf32, #tpu.memory_space<vmem>>, vector<16x128xf32>
      tpu.vector_store %arg7[%c0_22, %c0_23], %34 {strides = array<i32>} : memref<16x128xf32, #tpu.memory_space<vmem>>, vector<16x128xf32>,
    } else {
    }
    return
  }
  func.func @transform_0(%arg0: i32, %arg1: i32) -> (i32, i32) {
    %c0_i32 = arith.constant 0 : i32
    %c0_i32_0 = arith.constant 0 : i32
    return %arg0, %c0_i32 : i32, i32
  }
  func.func @transform_1(%arg0: i32, %arg1: i32) -> (i32, i32) {
    %c0_i32 = arith.constant 0 : i32
    %c0_i32_0 = arith.constant 0 : i32
    return %c0_i32, %arg1 : i32, i32
  }
  func.func @transform_2(%arg0: i32, %arg1: i32) -> (i32, i32) {
    %c0_i32 = arith.constant 0 : i32
    %c0_i32_0 = arith.constant 0 : i32
    return %c0_i32, %arg1 : i32, i32
  }
  func.func @transform_3(%arg0: i32, %arg1: i32) -> (i32, i32) {
    %c0_i32 = arith.constant 0 : i32
    %c0_i32_0 = arith.constant 0 : i32
    return %arg1, %c0_i32 : i32, i32
  }
  func.func @transform_4(%arg0: i32, %arg1: i32) -> (i32, i32) {
    %c0_i32 = arith.constant 0 : i32
    %c0_i32_0 = arith.constant 0 : i32
    %c0_i32_1 = arith.constant 0 : i32
    return %c0_i32, %c0_i32_0 : i32, i32
  }
  func.func @transform_5(%arg0: i32, %arg1: i32) -> (i32, i32) {
    %c0_i32 = arith.constant 0 : i32
    %c0_i32_0 = arith.constant 0 : i32
    return %arg0, %c0_i32 : i32, i32
  }
}

</mosaic_0001>

<llo_original>
// kernel: tpu_custom_call.1
$region0: #{tpu_custom_call.1}
  #allocation0 [shape = 'u32[]', space=smem, size = 0x4, offset = 0x4, fixed_abs, tag = 'smem constant byte address 0x4 - core index']
  #allocation1 [shape = 'u32[144,128]{1,0:T(1,128)}', space=vmem, size = 0x12000, scoped, tag = 'internal scratch']
  #allocation2 [shape = 'f32[16,128]{1,0:T(8,128)}', space=vmem, size = 0x2000, scoped, tag = 'scratch operand']
  %s0 = inlined_call_operand.hbm [shape: bf16[16,128], index: 0, kind: input, shape index: {}]
  %s1 = inlined_call_operand.hbm [shape: bf16[128,512], index: 1, kind: input, shape index: {}]
  %s2 = inlined_call_operand.vmem [shape: f32[1,512], index: 2, kind: input, shape index: {}]
  %s3 = inlined_call_operand.hbm [shape: bf16[512,128], index: 3, kind: input, shape index: {}]
  %s4 = inlined_call_operand.vmem [shape: f32[1,128], index: 4, kind: input, shape index: {}]
  %s5 = inlined_call_operand.hbm [shape: f32[16,128], index: 5, kind: output, shape index: {}]
  %s6 = sld [smem:[#allocation0]]
  $region73: #{tpu_custom_call.1} parent=0
    _
  %s8 = ssub.s32 1, %s6
  %s9 = scalar_select 0, %s8, %s6
  $region1: #{tpu_custom_call.1} parent=0
    #allocation3 [shape = 'u8[4096]{0}', space=vmem, size = 0x1000, scoped, tag = 'input window, operand 0, single buffered']
    #allocation4 [shape = 's32[2]{0}', space=sflag, size = 0x8, scoped, tag = 'scoped memory for tpu_custom_call.1']
    #allocation5 [shape = 's32[2]{0}', space=sflag, size = 0x8, scoped, tag = 'scoped memory for tpu_custom_call.1']
    #allocation6 [shape = 'u8[131072]{0}', space=vmem, size = 0x20000, scoped, tag = 'input window, operand 1']
    #allocation7 [shape = 's32[2]{0}', space=sflag, size = 0x8, scoped, tag = 'scoped memory for tpu_custom_call.1']
    #allocation8 [shape = 'u8[131072]{0}', space=vmem, size = 0x20000, scoped, tag = 'input window, operand 3']
    #allocation9 [shape = 'u8[8192]{0}', space=vmem, size = 0x2000, scoped, tag = 'output window, operand 0, single buffered']
    %10 = vsyncpa [#allocation4], 0
    %11 = vsyncpa [#allocation7], 0
    %s12 = scalar_lea.sflag [#allocation7], 1
    %13 = vsyncpa %s12, 0
    %14 = vsyncpa [#allocation5], 0
    loop: start=0, step=1, limit=4
    $region2: #{tpu_custom_call.1} parent=1 // loop_pre_header
      _
    $region3: #{tpu_custom_call.1} parent=1 // loop_header
      %s16 = sphi 0, %s20
      %p17 = scmp.ge.s32.totalorder %s16, 4
      %s23 = sphi 0, %s35
      %s24 = sphi 0, %s31
      %s25 = sphi 0, %s23
      %s26 = sphi 0, %s24
      %s27 = sphi 0, %s25
      %s28 = sphi 0, %s26
      %s38 = sphi 0, %s40
      %s41 = sphi 0, %s38
      %s42 = sphi 0, %s41
      %s58 = sphi 0, %s42
      %s64 = sphi 0, %s66
      %s67 = sphi 0, %s64
      %s68 = sphi 0, %s67
      %s84 = sphi 0, %s68
      %s90 = sphi 0, %s92
      %s93 = sphi 0, %s90
      %s94 = sphi 0, %s93
      %s110 = sphi 0, %s94
      %s116 = sphi 0, %s118
      %s119 = sphi 0, %s116
      %s120 = sphi 0, %s119
      %s136 = sphi 0, %s120
      %s140 = sphi 0, %s140
      %s142 = sphi 0, %s140
      %s143 = sphi 0, %s142
      %s157 = sphi 0, %s143
      %s163 = sphi 0, %s165
      %s166 = sphi 0, %s163
      %s167 = sphi 0, %s166
      %s183 = sphi 0, %s167
    $region4: #{tpu_custom_call.1} parent=1 // loop_header_branch
      %19 = sbr.rel (%p17) target = $region8
    $region5: #{tpu_custom_call.1} parent=1 // loop_body
      %s21 = ssub.s32 %s16, 1
      %s22 = ssub.s32 %s16, 2
      %s29 = sadd.s32 1, %s24
      %p30 = scmp.ge.s32.totalorder %s29, 2
      %s31 = scalar_select %p30, 0, %s29
      %s32 = sadd.s32 1, %s23
      %s33 = scalar_select %p30, %s32, %s23
      %p34 = scmp.ge.s32.totalorder %s33, 1
      %s35 = scalar_select %p34, 0, %s33
      %s36 = ssub.s32 %s23, %s35
      %p37 = scmp.eq.s32.totalorder %s36, 0
      %s39 = sadd.s32 %s38, 1
      %s40 = scalar_select %p37, %s38, %s39
      %p43 = pneg %p37
      %p44 = scmp.eq.s32.totalorder %s16, 1
      %p45 = por %p43, %p44
      %p46 = scmp.ne.s32.totalorder %s38, %s41
      %p47 = scmp.eq.s32.totalorder %s16, 0
      %p48 = por %p46, %p47
      %p49 = scmp.ne.s32.totalorder %s38, %s41
      %p50 = scmp.eq.s32.totalorder %s21, 1
      %p51 = por %p49, %p50
      %p52 = scmp.ne.s32.totalorder %s41, %s42
      %p53 = scmp.eq.s32.totalorder %s21, 0
      %p54 = por %p52, %p53
      %p55 = scmp.ne.s32.totalorder %s41, %s42
      %p56 = scmp.eq.s32.totalorder %s22, 1
      %p57 = por %p55, %p56
      %p59 = scmp.ne.s32.totalorder %s42, %s58
      %p60 = scmp.eq.s32.totalorder %s22, 0
      %p61 = por %p59, %p60
      %s62 = ssub.s32 %s24, %s31
      %p63 = scmp.eq.s32.totalorder %s62, 0
      %s65 = sadd.s32 %s64, 1
      %s66 = scalar_select %p63, %s64, %s65
      %p69 = pneg %p63
      %p70 = scmp.eq.s32.totalorder %s16, 1
      %p71 = por %p69, %p70
      %p72 = scmp.ne.s32.totalorder %s64, %s67
      %p73 = scmp.eq.s32.totalorder %s16, 0
      %p74 = por %p72, %p73
      %p75 = scmp.ne.s32.totalorder %s64, %s67
      %p76 = scmp.eq.s32.totalorder %s21, 1
      %p77 = por %p75, %p76
      %p78 = scmp.ne.s32.totalorder %s67, %s68
      %p79 = scmp.eq.s32.totalorder %s21, 0
      %p80 = por %p78, %p79
      %p81 = scmp.ne.s32.totalorder %s67, %s68
      %p82 = scmp.eq.s32.totalorder %s22, 1
      %p83 = por %p81, %p82
      %p85 = scmp.ne.s32.totalorder %s68, %s84
      %p86 = scmp.eq.s32.totalorder %s22, 0
      %p87 = por %p85, %p86
      %s88 = ssub.s32 %s24, %s31
      %p89 = scmp.eq.s32.totalorder %s88, 0
      %s91 = sadd.s32 %s90, 1
      %s92 = scalar_select %p89, %s90, %s91
      %p95 = pneg %p89
      %p96 = scmp.eq.s32.totalorder %s16, 1
      %p97 = por %p95, %p96
      %p98 = scmp.ne.s32.totalorder %s90, %s93
      %p99 = scmp.eq.s32.totalorder %s16, 0
      %p100 = por %p98, %p99
      %p101 = scmp.ne.s32.totalorder %s90, %s93
      %p102 = scmp.eq.s32.totalorder %s21, 1
      %p103 = por %p101, %p102
      %p104 = scmp.ne.s32.totalorder %s93, %s94
      %p105 = scmp.eq.s32.totalorder %s21, 0
      %p106 = por %p104, %p105
      %p107 = scmp.ne.s32.totalorder %s93, %s94
      %p108 = scmp.eq.s32.totalorder %s22, 1
      %p109 = por %p107, %p108
      %p111 = scmp.ne.s32.totalorder %s94, %s110
      %p112 = scmp.eq.s32.totalorder %s22, 0
      %p113 = por %p111, %p112
      %s114 = ssub.s32 %s24, %s31
      %p115 = scmp.eq.s32.totalorder %s114, 0
      %s117 = sadd.s32 %s116, 1
      %s118 = scalar_select %p115, %s116, %s117
      %p121 = pneg %p115
      %p122 = scmp.eq.s32.totalorder %s16, 1
      %p123 = por %p121, %p122
      %p124 = scmp.ne.s32.totalorder %s116, %s119
      %p125 = scmp.eq.s32.totalorder %s16, 0
      %p126 = por %p124, %p125
      %p127 = scmp.ne.s32.totalorder %s116, %s119
      %p128 = scmp.eq.s32.totalorder %s21, 1
      %p129 = por %p127, %p128
      %p130 = scmp.ne.s32.totalorder %s119, %s120
      %p131 = scmp.eq.s32.totalorder %s21, 0
      %p132 = por %p130, %p131
      %p133 = scmp.ne.s32.totalorder %s119, %s120
      %p134 = scmp.eq.s32.totalorder %s22, 1
      %p135 = por %p133, %p134
      %p137 = scmp.ne.s32.totalorder %s120, %s136
      %p138 = scmp.eq.s32.totalorder %s22, 0
      %p139 = por %p137, %p138
      %s141 = sadd.s32 %s140, 1
      %p144 = scmp.eq.s32.totalorder %s16, 1
      %p145 = scmp.ne.s32.totalorder %s140, %s142
      %p146 = scmp.eq.s32.totalorder %s16, 0
      %p147 = por %p145, %p146
      %p148 = scmp.ne.s32.totalorder %s140, %s142
      %p149 = scmp.eq.s32.totalorder %s21, 1
      %p150 = por %p148, %p149
      %p151 = scmp.ne.s32.totalorder %s142, %s143
      %p152 = scmp.eq.s32.totalorder %s21, 0
      %p153 = por %p151, %p152
      %p154 = scmp.ne.s32.totalorder %s142, %s143
      %p155 = scmp.eq.s32.totalorder %s22, 1
      %p156 = por %p154, %p155
      %p158 = scmp.ne.s32.totalorder %s143, %s157
      %p159 = scmp.eq.s32.totalorder %s22, 0
      %p160 = por %p158, %p159
      %s161 = ssub.s32 %s23, %s35
      %p162 = scmp.eq.s32.totalorder %s161, 0
      %s164 = sadd.s32 %s163, 1
      %s165 = scalar_select %p162, %s163, %s164
      %p168 = pneg %p162
      %p169 = scmp.eq.s32.totalorder %s16, 1
      %p170 = por %p168, %p169
      %p171 = scmp.ne.s32.totalorder %s163, %s166
      %p172 = scmp.eq.s32.totalorder %s16, 0
      %p173 = por %p171, %p172
      %p174 = scmp.ne.s32.totalorder %s163, %s166
      %p175 = scmp.eq.s32.totalorder %s21, 1
      %p176 = por %p174, %p175
      %p177 = scmp.ne.s32.totalorder %s166, %s167
      %p178 = scmp.eq.s32.totalorder %s21, 0
      %p179 = por %p177, %p178
      %p180 = scmp.ne.s32.totalorder %s166, %s167
      %p181 = scmp.eq.s32.totalorder %s22, 1
      %p182 = por %p180, %p181
      %p184 = scmp.ne.s32.totalorder %s167, %s183
      %p185 = scmp.eq.s32.totalorder %s22, 0
      %p186 = por %p184, %p185
      %p187 = scmp.le.s32.totalorder 1, %s16
      %p188 = scmp.lt.s32.totalorder %s16, 3
      %p189 = pnand %p187, %p188
      %p190 = pneg %p189
      // Predicated region
      $region9: #{tpu_custom_call.1} parent=5 // pred_check
        _
      $region10: #{tpu_custom_call.1} parent=5 // pred_check_branch
        %192 = sbr.rel (%p189) target = $region12
      $region11: #{tpu_custom_call.1} parent=5 // pred_region
        %s193 = ssub.s32 %s16, 1
        // Predicated region
        $region13: #{tpu_custom_call.1} parent=11 // pred_check
          %p194 = pneg %p54
        $region14: #{tpu_custom_call.1} parent=11 // pred_check_branch
          %196 = sbr.rel (%p194) target = $region16
        $region15: #{tpu_custom_call.1} parent=11 // pred_region
          %s197 = smul.u32 2, %s25
          %s199 = ssub.s32 128, 128
          %200 = vsyncadd [#allocation4], %s199
          %s201 = smul.addr %s197, 64
          %s202 = scalar_lea.hbm %s0, %s201
          %s203 = sshll.u32 [#allocation3], 4
          %s204 = int_to_ptr.vmem [resolvable:$true] %s203
          %209 = dma.hbm_to_vmem [thread:$0]  %s202, 128, %s204, [#allocation4], 64, 64, 4
        $region16: #{tpu_custom_call.1} parent=11 // pred_fallthru
          _
        // Predicated region
        $region17: #{tpu_custom_call.1} parent=11 // pred_check
          %p210 = pneg %p153
        $region18: #{tpu_custom_call.1} parent=11 // pred_check_branch
          %212 = sbr.rel (%p210) target = $region20
        $region19: #{tpu_custom_call.1} parent=11 // pred_region
          _
        $region20: #{tpu_custom_call.1} parent=11 // pred_fallthru
          _
      $region12: #{tpu_custom_call.1} parent=5 // pred_fallthru
        _
      %p213 = scmp.lt.s32.totalorder %s16, 2
      // Predicated region
      $region21: #{tpu_custom_call.1} parent=5 // pred_check
        %p214 = pneg %p213
      $region22: #{tpu_custom_call.1} parent=5 // pred_check_branch
        %216 = sbr.rel (%p214) target = $region24
      $region23: #{tpu_custom_call.1} parent=5 // pred_region
        // Predicated region
        $region25: #{tpu_custom_call.1} parent=23 // pred_check
          %p217 = pneg %p74
        $region26: #{tpu_custom_call.1} parent=23 // pred_check_branch
          %219 = sbr.rel (%p217) target = $region28
        $region27: #{tpu_custom_call.1} parent=23 // pred_region
          %s220 = sand.u32 %s16, 1
          %s221 = scalar_lea.sflag [#allocation7], %s220
          %s222 = sand.u32 %s64, 1
          %s223 = smul.addr %s222, 128
          %s224 = scalar_lea.vmem [#allocation6], %s223
          %s225 = smul.u32 2, %s24
          %s227 = ssub.s32 2048, 2048
          %228 = vsyncadd %s221, %s227
          %s229 = smul.addr %s225, 64
          %s230 = scalar_lea.hbm %s1, %s229
          %s231 = sshll.u32 %s224, 4
          %s232 = int_to_ptr.vmem [resolvable:$true] %s231
          %237 = dma.hbm_to_vmem [thread:$0]  %s230, 2048, %s232, %s221, 256, 128, 8
        $region28: #{tpu_custom_call.1} parent=23 // pred_fallthru
          _
        // Predicated region
        $region29: #{tpu_custom_call.1} parent=23 // pred_check
          %p238 = pneg %p100
        $region30: #{tpu_custom_call.1} parent=23 // pred_check_branch
          %240 = sbr.rel (%p238) target = $region32
        $region31: #{tpu_custom_call.1} parent=23 // pred_region
          %s241 = smul.u32 2, %s24
          %p242 = scmp.lt.s32.totalorder %s241, 3
          %s243 = scalar_select %p242, %s241, 3
          %s244 = scalar_lea.vmem %s2, %s243
          %s245 = smul.u32 2, %s24
        $region32: #{tpu_custom_call.1} parent=23 // pred_fallthru
          _
        // Predicated region
        $region33: #{tpu_custom_call.1} parent=23 // pred_check
          %p246 = pneg %p126
        $region34: #{tpu_custom_call.1} parent=23 // pred_check_branch
          %248 = sbr.rel (%p246) target = $region36
        $region35: #{tpu_custom_call.1} parent=23 // pred_region
          %s249 = sand.u32 %s16, 1
          %s250 = scalar_lea.sflag [#allocation7], %s249
          %s251 = sand.u32 %s116, 1
          %s252 = smul.addr %s251, 128
          %s253 = scalar_lea.vmem [#allocation8], %s252
          %s254 = smul.u32 32, %s24
          %s256 = ssub.s32 2048, 2048
          %257 = vsyncadd %s250, %s256
          %s258 = smul.addr %s254, 64
          %s259 = scalar_lea.hbm %s3, %s258
          %s260 = sshll.u32 %s253, 4
          %s261 = int_to_ptr.vmem [resolvable:$true] %s260
          %266 = dma.hbm_to_vmem [thread:$0]  %s259, 2048, %s261, %s250, 64, 64, 4
        $region36: #{tpu_custom_call.1} parent=23 // pred_fallthru
          _
      $region24: #{tpu_custom_call.1} parent=5 // pred_fallthru
        _
      %p267 = scmp.le.s32.totalorder 1, %s16
      %p268 = scmp.lt.s32.totalorder %s16, 3
      %p269 = pnand %p267, %p268
      %p270 = pneg %p269
      // Predicated region
      $region37: #{tpu_custom_call.1} parent=5 // pred_check
        _
      $region38: #{tpu_custom_call.1} parent=5 // pred_check_branch
        %272 = sbr.rel (%p269) target = $region40
      $region39: #{tpu_custom_call.1} parent=5 // pred_region
        %s273 = ssub.s32 %s16, 1
        // Predicated region
        $region41: #{tpu_custom_call.1} parent=39 // pred_check
          %p274 = pneg %p54
        $region42: #{tpu_custom_call.1} parent=39 // pred_check_branch
          %276 = sbr.rel (%p274) target = $region44
        $region43: #{tpu_custom_call.1} parent=39 // pred_region
          %277 = dma.done [#allocation4], 128
        $region44: #{tpu_custom_call.1} parent=39 // pred_fallthru
          _
        %s278 = sand.u32 %s21, 1
        %s279 = scalar_lea.sflag [#allocation7], %s278
        %s280 = sand.u32 %s67, 1
        %s281 = smul.addr %s280, 128
        %s282 = scalar_lea.vmem [#allocation6], %s281
        // Predicated region
        $region45: #{tpu_custom_call.1} parent=39 // pred_check
          %p283 = pneg %p80
        $region46: #{tpu_custom_call.1} parent=39 // pred_check_branch
          %285 = sbr.rel (%p283) target = $region48
        $region47: #{tpu_custom_call.1} parent=39 // pred_region
          %286 = dma.done %s279, 2048
        $region48: #{tpu_custom_call.1} parent=39 // pred_fallthru
          _
        %s287 = sand.u32 %s21, 1
        %s288 = scalar_lea.sflag [#allocation7], %s287
        %s289 = sand.u32 %s119, 1
        %s290 = smul.addr %s289, 128
        %s291 = scalar_lea.vmem [#allocation8], %s290
        // Predicated region
        $region49: #{tpu_custom_call.1} parent=39 // pred_check
          %p292 = pneg %p132
        $region50: #{tpu_custom_call.1} parent=39 // pred_check_branch
          %294 = sbr.rel (%p292) target = $region52
        $region51: #{tpu_custom_call.1} parent=39 // pred_region
          %295 = dma.done %s288, 2048
        $region52: #{tpu_custom_call.1} parent=39 // pred_fallthru
          _
        %p296 = pneg %p54
        %p297 = pneg %p51
        %s298 = sand.u32 %s21, 1
        %s299 = scalar_lea.sflag [#allocation7], %s298
        %s300 = sand.u32 %s67, 1
        %s301 = smul.addr %s300, 128
        %s302 = scalar_lea.vmem [#allocation6], %s301
        %p303 = pneg %p80
        %p304 = pneg %p77
        %s305 = smul.u32 2, %s26
        %p306 = scmp.lt.s32.totalorder %s305, 3
        %s307 = scalar_select %p306, %s305, 3
        %s308 = scalar_lea.vmem %s2, %s307
        %p309 = pneg %p106
        %p310 = pneg %p103
        %s311 = sand.u32 %s21, 1
        %s312 = scalar_lea.sflag [#allocation7], %s311
        %s313 = sand.u32 %s119, 1
        %s314 = smul.addr %s313, 128
        %s315 = scalar_lea.vmem [#allocation8], %s314
        %p316 = pneg %p132
        %p317 = pneg %p129
        %p318 = pneg %p153
        %p319 = pneg %p150
        %p320 = pneg %p179
        %p321 = pneg %p176
        %s322 = smul.u32 2, %s25
        %s323 = smul.u32 2, %s26
        %s324 = smul.u32 2, %s26
        %p325 = scmp.lt.s32.totalorder %s324, 3
        %s326 = scalar_select %p325, %s324, 3
        %s327 = scalar_lea.vmem %s2, %s326
        %s328 = smul.u32 2, %s26
        %s329 = smul.u32 32, %s26
        %s330 = smul.u32 2, %s25
        %p332 = scmp.eq.s32.totalorder %s26, 0
        // Predicated region
        $region53: #{tpu_custom_call.1} parent=39 // pred_check
          %p333 = pneg %p332
        $region54: #{tpu_custom_call.1} parent=39 // pred_check_branch
          %335 = sbr.rel (%p333) target = $region56
        $region55: #{tpu_custom_call.1} parent=39 // pred_region
          %336 = vst [vmem:[#allocation2] sm:$0xff] 0.0
          %337 = vst [vmem:[#allocation2 + $0x8] sm:$0xff] 0.0
        $region56: #{tpu_custom_call.1} parent=39 // pred_fallthru
          _
        %v338 = vld [vmem:[#allocation3] sm:$0xf]
        %v339 = vld [vmem:[#allocation3 + $0x4] sm:$0xf]
        %v340 = vld [vmem:[%s282] sm:$0xff]
        %v341 = vld [vmem:[%s282 + $0x8] sm:$0xff]
        %v342 = vld [vmem:[%s282 + $0x10] sm:$0xff]
        %v343 = vld [vmem:[%s282 + $0x18] sm:$0xff]
        %v344 = vld [vmem:[%s282 + $0x20] sm:$0xff]
        %v345 = vld [vmem:[%s282 + $0x28] sm:$0xff]
        %v346 = vld [vmem:[%s282 + $0x30] sm:$0xff]
        %v347 = vld [vmem:[%s282 + $0x38] sm:$0xff]
        %v348 = vld [vmem:[%s282 + $0x40] sm:$0xff]
        %v349 = vld [vmem:[%s282 + $0x48] sm:$0xff]
        %v350 = vld [vmem:[%s282 + $0x50] sm:$0xff]
        %v351 = vld [vmem:[%s282 + $0x58] sm:$0xff]
        %v352 = vld [vmem:[%s282 + $0x60] sm:$0xff]
        %v353 = vld [vmem:[%s282 + $0x68] sm:$0xff]
        %v354 = vld [vmem:[%s282 + $0x70] sm:$0xff]
        %v355 = vld [vmem:[%s282 + $0x78] sm:$0xff]
        %v356 = vld [vmem:[%s327] sm:$0x3]
        %v358 = vlaneseq
        %v359 = vshrl.u32 %v358, 7
        %v360 = vsub.s32 0, %v359
        %v361 = vrot.slane %v356, %v360
        %v362 = vlaneseq
        %v363 = vshrl.u32 %v362, 7
        %v364 = vsub.s32 1, %v363
        %v365 = vrot.slane %v356, %v364
        %v370 = vunpack.c.l.b16 %v338
        %v371 = vunpack.c.l.b16 %v339
        %v372 = vpack.c.b16 %v371, %v370
        %v390 = vunpack.c.l.b16 %v340
        %v391 = vunpack.c.h.b16 %v340
        %v392 = vunpack.c.l.b16 %v341
        %v393 = vunpack.c.h.b16 %v341
        %v394 = vunpack.c.l.b16 %v342
        %v395 = vunpack.c.h.b16 %v342
        %v396 = vunpack.c.l.b16 %v343
        %v397 = vunpack.c.h.b16 %v343
        %v398 = vunpack.c.l.b16 %v344
        %v399 = vunpack.c.h.b16 %v344
        %v400 = vunpack.c.l.b16 %v345
        %v401 = vunpack.c.h.b16 %v345
        %v402 = vunpack.c.l.b16 %v346
        %v403 = vunpack.c.h.b16 %v346
        %v404 = vunpack.c.l.b16 %v347
        %v405 = vunpack.c.h.b16 %v347
        %v406 = vunpack.c.l.b16 %v348
        %v407 = vunpack.c.h.b16 %v348
        %v408 = vunpack.c.l.b16 %v349
        %v409 = vunpack.c.h.b16 %v349
        %v410 = vunpack.c.l.b16 %v350
        %v411 = vunpack.c.h.b16 %v350
        %v412 = vunpack.c.l.b16 %v351
        %v413 = vunpack.c.h.b16 %v351
        %v414 = vunpack.c.l.b16 %v352
        %v415 = vunpack.c.h.b16 %v352
        %v416 = vunpack.c.l.b16 %v353
        %v417 = vunpack.c.h.b16 %v353
        %v418 = vunpack.c.l.b16 %v354
        %v419 = vunpack.c.h.b16 %v354
        %v420 = vunpack.c.l.b16 %v355
        %v421 = vunpack.c.h.b16 %v355
        %v422 = vpack.c.b16 %v392, %v390
        %v423 = vpack.c.b16 %v393, %v391
        %v424 = vpack.c.b16 %v396, %v394
        %v425 = vpack.c.b16 %v397, %v395
        %v426 = vpack.c.b16 %v400, %v398
        %v427 = vpack.c.b16 %v401, %v399
        %v428 = vpack.c.b16 %v404, %v402
        %v429 = vpack.c.b16 %v405, %v403
        %v430 = vpack.c.b16 %v408, %v406
        %v431 = vpack.c.b16 %v409, %v407
        %v432 = vpack.c.b16 %v412, %v410
        %v433 = vpack.c.b16 %v413, %v411
        %v434 = vpack.c.b16 %v416, %v414
        %v435 = vpack.c.b16 %v417, %v415
        %v436 = vpack.c.b16 %v420, %v418
        %v437 = vpack.c.b16 %v421, %v419
        %454 = vmatprep.subr.bf16.mxu0 %v423
        %455 = vmatpush1.bf16.msra.mxu0 %v422
        %456 = vmatprep.subr.bf16.mxu0 %v425
        %457 = vmatpush1.bf16.msra.mxu0 %v424
        %458 = vmatprep.subr.bf16.mxu0 %v427
        %459 = vmatpush1.bf16.msra.mxu0 %v426
        %460 = vmatprep.subr.bf16.mxu0 %v429
        %461 = vmatpush1.bf16.msra.mxu0 %v428
        %462 = vmatprep.subr.bf16.mxu0 %v431
        %463 = vmatpush1.bf16.msra.mxu0 %v430
        %464 = vmatprep.subr.bf16.mxu0 %v433
        %465 = vmatpush1.bf16.msra.mxu0 %v432
        %466 = vmatprep.subr.bf16.mxu0 %v435
        %467 = vmatpush1.bf16.msra.mxu0 %v434
        %468 = vmatprep.subr.bf16.mxu0 %v437
        %469 = vmatpush1.bf16.msra.mxu0 %v436
        %470 = vmatprep.subr.bf16.mxu0 0
        %471 = vmatpush1.bf16.msra.mxu0 0
        %472 = vmatprep.subr.bf16.mxu0 0
        %473 = vmatpush1.bf16.msra.mxu0 0
        %474 = vmatprep.subr.bf16.mxu0 0
        %475 = vmatpush1.bf16.msra.mxu0 0
        %476 = vmatprep.subr.bf16.mxu0 0
        %477 = vmatpush1.bf16.msra.mxu0 0
        %478 = vmatprep.subr.bf16.mxu0 0
        %479 = vmatpush1.bf16.msra.mxu0 0
        %480 = vmatprep.subr.bf16.mxu0 0
        %481 = vmatpush1.bf16.msra.mxu0 0
        %482 = vmatprep.subr.bf16.mxu0 0
        %483 = vmatpush1.bf16.msra.mxu0 0
        %484 = vmatprep.subr.bf16.mxu0 0
        %485 = vmatpush1.bf16.msra.mxu0 0
        %486 = vmatprep.mubr.bf16.mxu0 0
        %487 = vmatmul.mubr.bf16.gmra.mrb[0].mxu0 %v372
        %v488 = vpop.f32.mrb[0].mxu0
        %v489 = vadd.f32 %v361, %v488
        %v490 = vpop.f32.mrb[0].mxu0
        %v491 = vadd.f32 %v365, %v490
        %v492 = vpop.f32.mrb[0].mxu0
        %v493 = vadd.f32 %v361, %v492
        %v494 = vpop.f32.mrb[0].mxu0
        %v495 = vadd.f32 %v365, %v494
        %496 = vdwg.mxu0
        %v497 = vmul.f32 %v489, 0.5
        %v498 = vmul.f32 %v491, 0.5
        %v499 = vmul.f32 %v493, 0.5
        %v500 = vmul.f32 %v495, 0.5
        %v501 = vmul.f32 %v489, 0.044715
        %v502 = vmul.f32 %v491, 0.044715
        %v503 = vmul.f32 %v493, 0.044715
        %v504 = vmul.f32 %v495, 0.044715
        %v505 = vmul.f32 %v501, %v489
        %v506 = vmul.f32 %v502, %v491
        %v507 = vmul.f32 %v503, %v493
        %v508 = vmul.f32 %v504, %v495
        %v509 = vmul.f32 %v505, %v489
        %v510 = vmul.f32 %v506, %v491
        %v511 = vmul.f32 %v507, %v493
        %v512 = vmul.f32 %v508, %v495
        %v513 = vadd.f32 %v489, %v509
        %v514 = vadd.f32 %v491, %v510
        %v515 = vadd.f32 %v493, %v511
        %v516 = vadd.f32 %v495, %v512
        %v517 = vmul.f32 %v513, 0.7978846
        %v518 = vmul.f32 %v514, 0.7978846
        %v519 = vmul.f32 %v515, 0.7978846
        %v520 = vmul.f32 %v516, 0.7978846
        %v521 = vtanh.pop %v517
        %v522 = vtanh.pop %v518
        %v523 = vtanh.pop %v519
        %v524 = vtanh.pop %v520
        %v525 = vadd.f32 %v521, 1.0
        %v526 = vadd.f32 %v522, 1.0
        %v527 = vadd.f32 %v523, 1.0
        %v528 = vadd.f32 %v524, 1.0
        %v529 = vmul.f32 %v497, %v525
        %v530 = vmul.f32 %v498, %v526
        %v531 = vmul.f32 %v499, %v527
        %v532 = vmul.f32 %v500, %v528
        %v533 = vld [vmem:[#allocation2] sm:$0xff]
        %v534 = vld [vmem:[#allocation2 + $0x8] sm:$0xff]
        %v535 = vpack.c.bf16 %v531, %v529
        %v536 = vpack.c.bf16 %v532, %v530
        %v537 = vld [vmem:[%s291] sm:$0xf]
        %v538 = vld [vmem:[%s291 + $0x4] sm:$0xf]
        %v539 = vld [vmem:[%s291 + $0x8] sm:$0xf]
        %v540 = vld [vmem:[%s291 + $0xc] sm:$0xf]
        %v541 = vld [vmem:[%s291 + $0x10] sm:$0xf]
        %v542 = vld [vmem:[%s291 + $0x14] sm:$0xf]
        %v543 = vld [vmem:[%s291 + $0x18] sm:$0xf]
        %v544 = vld [vmem:[%s291 + $0x1c] sm:$0xf]
        %v545 = vld [vmem:[%s291 + $0x20] sm:$0xf]
        %v546 = vld [vmem:[%s291 + $0x24] sm:$0xf]
        %v547 = vld [vmem:[%s291 + $0x28] sm:$0xf]
        %v548 = vld [vmem:[%s291 + $0x2c] sm:$0xf]
        %v549 = vld [vmem:[%s291 + $0x30] sm:$0xf]
        %v550 = vld [vmem:[%s291 + $0x34] sm:$0xf]
        %v551 = vld [vmem:[%s291 + $0x38] sm:$0xf]
        %v552 = vld [vmem:[%s291 + $0x3c] sm:$0xf]
        %v553 = vld [vmem:[%s291 + $0x40] sm:$0xf]
        %v554 = vld [vmem:[%s291 + $0x44] sm:$0xf]
        %v555 = vld [vmem:[%s291 + $0x48] sm:$0xf]
        %v556 = vld [vmem:[%s291 + $0x4c] sm:$0xf]
        %v557 = vld [vmem:[%s291 + $0x50] sm:$0xf]
        %v558 = vld [vmem:[%s291 + $0x54] sm:$0xf]
        %v559 = vld [vmem:[%s291 + $0x58] sm:$0xf]
        %v560 = vld [vmem:[%s291 + $0x5c] sm:$0xf]
        %v561 = vld [vmem:[%s291 + $0x60] sm:$0xf]
        %v562 = vld [vmem:[%s291 + $0x64] sm:$0xf]
        %v563 = vld [vmem:[%s291 + $0x68] sm:$0xf]
        %v564 = vld [vmem:[%s291 + $0x6c] sm:$0xf]
        %v565 = vld [vmem:[%s291 + $0x70] sm:$0xf]
        %v566 = vld [vmem:[%s291 + $0x74] sm:$0xf]
        %v567 = vld [vmem:[%s291 + $0x78] sm:$0xf]
        %v568 = vld [vmem:[%s291 + $0x7c] sm:$0xf]
        %v601 = vunpack.c.l.b16 %v537
        %v602 = vunpack.c.l.b16 %v538
        %v603 = vunpack.c.l.b16 %v539
        %v604 = vunpack.c.l.b16 %v540
        %v605 = vunpack.c.l.b16 %v541
        %v606 = vunpack.c.l.b16 %v542
        %v607 = vunpack.c.l.b16 %v543
        %v608 = vunpack.c.l.b16 %v544
        %v609 = vunpack.c.l.b16 %v545
        %v610 = vunpack.c.l.b16 %v546
        %v611 = vunpack.c.l.b16 %v547
        %v612 = vunpack.c.l.b16 %v548
        %v613 = vunpack.c.l.b16 %v549
        %v614 = vunpack.c.l.b16 %v550
        %v615 = vunpack.c.l.b16 %v551
        %v616 = vunpack.c.l.b16 %v552
        %v617 = vunpack.c.l.b16 %v553
        %v618 = vunpack.c.l.b16 %v554
        %v619 = vunpack.c.l.b16 %v555
        %v620 = vunpack.c.l.b16 %v556
        %v621 = vunpack.c.l.b16 %v557
        %v622 = vunpack.c.l.b16 %v558
        %v623 = vunpack.c.l.b16 %v559
        %v624 = vunpack.c.l.b16 %v560
        %v625 = vunpack.c.l.b16 %v561
        %v626 = vunpack.c.l.b16 %v562
        %v627 = vunpack.c.l.b16 %v563
        %v628 = vunpack.c.l.b16 %v564
        %v629 = vunpack.c.l.b16 %v565
        %v630 = vunpack.c.l.b16 %v566
        %v631 = vunpack.c.l.b16 %v567
        %v632 = vunpack.c.l.b16 %v568
        %v633 = vpack.c.b16 %v602, %v601
        %v634 = vpack.c.b16 %v604, %v603
        %v635 = vpack.c.b16 %v606, %v605
        %v636 = vpack.c.b16 %v608, %v607
        %v637 = vpack.c.b16 %v610, %v609
        %v638 = vpack.c.b16 %v612, %v611
        %v639 = vpack.c.b16 %v614, %v613
        %v640 = vpack.c.b16 %v616, %v615
        %v641 = vpack.c.b16 %v618, %v617
        %v642 = vpack.c.b16 %v620, %v619
        %v643 = vpack.c.b16 %v622, %v621
        %v644 = vpack.c.b16 %v624, %v623
        %v645 = vpack.c.b16 %v626, %v625
        %v646 = vpack.c.b16 %v628, %v627
        %v647 = vpack.c.b16 %v630, %v629
        %v648 = vpack.c.b16 %v632, %v631
        %665 = vmatprep.subr.bf16.mxu0 0
        %666 = vmatpush1.bf16.msra.mxu0 %v633
        %667 = vmatprep.subr.bf16.mxu0 0
        %668 = vmatpush1.bf16.msra.mxu0 %v634
        %669 = vmatprep.subr.bf16.mxu0 0
        %670 = vmatpush1.bf16.msra.mxu0 %v635
        %671 = vmatprep.subr.bf16.mxu0 0
        %672 = vmatpush1.bf16.msra.mxu0 %v636
        %673 = vmatprep.subr.bf16.mxu0 0
        %674 = vmatpush1.bf16.msra.mxu0 %v637
        %675 = vmatprep.subr.bf16.mxu0 0
        %676 = vmatpush1.bf16.msra.mxu0 %v638
        %677 = vmatprep.subr.bf16.mxu0 0
        %678 = vmatpush1.bf16.msra.mxu0 %v639
        %679 = vmatprep.subr.bf16.mxu0 0
        %680 = vmatpush1.bf16.msra.mxu0 %v640
        %681 = vmatprep.subr.bf16.mxu0 0
        %682 = vmatpush1.bf16.msra.mxu0 %v641
        %683 = vmatprep.subr.bf16.mxu0 0
        %684 = vmatpush1.bf16.msra.mxu0 %v642
        %685 = vmatprep.subr.bf16.mxu0 0
        %686 = vmatpush1.bf16.msra.mxu0 %v643
        %687 = vmatprep.subr.bf16.mxu0 0
        %688 = vmatpush1.bf16.msra.mxu0 %v644
        %689 = vmatprep.subr.bf16.mxu0 0
        %690 = vmatpush1.bf16.msra.mxu0 %v645
        %691 = vmatprep.subr.bf16.mxu0 0
        %692 = vmatpush1.bf16.msra.mxu0 %v646
        %693 = vmatprep.subr.bf16.mxu0 0
        %694 = vmatpush1.bf16.msra.mxu0 %v647
        %695 = vmatprep.subr.bf16.mxu0 0
        %696 = vmatpush1.bf16.msra.mxu0 %v648
        %697 = vmatprep.mubr.bf16.mxu0 %v536
        %698 = vmatmul.mubr.bf16.gmra.mrb[0].mxu0 %v535
        %v699 = vpop.f32.mrb[0].mxu0
        %v700 = vadd.f32 0.0, %v699
        %v701 = vpop.f32.mrb[0].mxu0
        %v702 = vpop.f32.mrb[0].mxu0
        %v703 = vadd.f32 0.0, %v702
        %v704 = vpop.f32.mrb[0].mxu0
        %705 = vdwg.mxu0
        %v706 = vadd.f32 %v533, %v700
        %v707 = vadd.f32 %v534, %v703
        %708 = vst [vmem:[#allocation2] sm:$0xff] %v706
        %709 = vst [vmem:[#allocation2 + $0x8] sm:$0xff] %v707
        %p710 = scmp.eq.s32.totalorder %s26, 1
        // Predicated region
        $region57: #{tpu_custom_call.1} parent=39 // pred_check
          %p711 = pneg %p710
        $region58: #{tpu_custom_call.1} parent=39 // pred_check_branch
          %713 = sbr.rel (%p711) target = $region60
        $region59: #{tpu_custom_call.1} parent=39 // pred_region
          %v714 = vld [vmem:[#allocation2] sm:$0xff]
          %v715 = vld [vmem:[#allocation2 + $0x8] sm:$0xff]
          %v716 = vld [vmem:[%s4] sm:$0x1]
          %v718 = vlaneseq
          %v719 = vshrl.u32 %v718, 7
          %v720 = vsub.s32 0, %v719
          %v721 = vrot.slane %v716, %v720
          %v723 = vadd.f32 %v714, %v721
          %v724 = vadd.f32 %v715, %v721
          %725 = vst [vmem:[#allocation9] sm:$0xff] %v723
          %726 = vst [vmem:[#allocation9 + $0x8] sm:$0xff] %v724
        $region60: #{tpu_custom_call.1} parent=39 // pred_fallthru
          _
        // Predicated region
        $region61: #{tpu_custom_call.1} parent=39 // pred_check
          %p727 = pneg %p176
        $region62: #{tpu_custom_call.1} parent=39 // pred_check_branch
          %729 = sbr.rel (%p727) target = $region64
        $region63: #{tpu_custom_call.1} parent=39 // pred_region
          %s730 = smul.u32 2, %s25
          %s732 = ssub.s32 256, 256
          %733 = vsyncadd [#allocation5], %s732
          %s734 = smul.addr %s730, 128
          %s735 = scalar_lea.hbm %s5, %s734
          %s736 = sshll.u32 [#allocation9], 4
          %s737 = int_to_ptr.vmem [resolvable:$true] %s736
          %742 = dma.vmem_to_hbm [thread:$0]  %s737, 256, %s735, [#allocation5], 128, 128, 8
        $region64: #{tpu_custom_call.1} parent=39 // pred_fallthru
          _
        // Predicated region
        $region65: #{tpu_custom_call.1} parent=39 // pred_check
          %p743 = pneg %p176
        $region66: #{tpu_custom_call.1} parent=39 // pred_check_branch
          %745 = sbr.rel (%p743) target = $region68
        $region67: #{tpu_custom_call.1} parent=39 // pred_region
          %746 = dma.done [#allocation5], 256
        $region68: #{tpu_custom_call.1} parent=39 // pred_fallthru
          _
      $region40: #{tpu_custom_call.1} parent=5 // pred_fallthru
        _
      %p747 = scmp.le.s32.totalorder 2, %s16
      // Predicated region
      $region69: #{tpu_custom_call.1} parent=5 // pred_check
        %p748 = pneg %p747
      $region70: #{tpu_custom_call.1} parent=5 // pred_check_branch
        %750 = sbr.rel (%p748) target = $region72
      $region71: #{tpu_custom_call.1} parent=5 // pred_region
        %s751 = ssub.s32 %s16, 2
      $region72: #{tpu_custom_call.1} parent=5 // pred_fallthru
        _
    $region6: #{tpu_custom_call.1} parent=1 // loop_footer
      %s20 = sadd.s32 1, %s16
    $region7: #{tpu_custom_call.1} parent=1 // loop_footer_branch
      %15 = sbr.rel target = $region3
    $region8: #{tpu_custom_call.1} parent=1 // loop_exit
      _
    %752 = vsyncpa [#allocation4], 1
    %s753 = scalar_lea.sflag [#allocation4], 1
    %754 = vsyncpa %s753, 1
    %755 = vsyncpa [#allocation7], 1
    %s756 = scalar_lea.sflag [#allocation7], 1
    %757 = vsyncpa %s756, 1
    %758 = vsyncpa [#allocation5], 1
    %s759 = scalar_lea.sflag [#allocation5], 1
    %760 = vsyncpa %s759, 1

</llo_original>
